<compile_context>
chip_gen: v5e
topology: v5e:2x2
jax: 0.10.0
libtpu: 0.0.40
codegen_flags: <defaults>
</compile_context>

<pallas_src>
import jax
import jax.numpy as jnp
from jax.experimental import pallas as pl
from jax.experimental.pallas import tpu as pltpu

# Problem sizes (small, consistent with the module's shapes).
N, H, W = 2, 16, 16
CIN, CMID, NCLASS = 4, 8, 4
CIN_PAD = 8                       # pad Cin to one full sublane tile
HW = H * W                        # 256 -> 2 full lane tiles
PAD_LEN = HW + 2 * (W + 1)        # flattened, height+edge padded row length (290)
BN_EPS = 1e-5


def _bisehead_kernel(x_ref, w1_ref, w2_ref, bias_ref, o_ref, slab_ref):
    """Fused 3x3 ConvBNReLU + 1x1 conv for the whole batch (one grid step).

    x_ref:    (N*CIN, HW)            NCHW input, flattened (no pre-padding)
    w1_ref:   (CMID, 9*CIN_PAD)      3x3 weights, BN scale folded, (dy,dx,c)-major
    w2_ref:   (N*NCLASS, N*CMID)     block-diagonal (batch-stacked) 1x1 weights
    bias_ref: (CMID + N*NCLASS, 1)   [0:CMID]=folded BN bias, rest=stacked conv2 bias
    o_ref:    (N*NCLASS, HW)         full-(8,128)-tile output store
    slab_ref: (N, CIN_PAD, PAD_LEN)  VMEM scratch: zero-padded flattened input
    """
    w1 = w1_ref[...]                              # (CMID, 9*CIN_PAD)
    w2 = w2_ref[...]                              # (N*NCLASS, N*CMID)
    bn_bias = bias_ref[0:CMID, :]                 # (CMID, 1)
    b2 = bias_ref[CMID:CMID + N * NCLASS, :]      # (N*NCLASS, 1)

    # ---- In-kernel padding (replaces the wrapper jnp.pad): zero the scratch
    # ---- and drop the valid data at lane offset W+1 (== one-row height halo
    # ---- plus one spare element so every tap slice stays in bounds).
    slab_ref[...] = jnp.zeros_like(slab_ref)
    for n in range(N):
        slab_ref[n, 0:CIN, W + 1:W + 1 + HW] = x_ref[n * CIN:(n + 1) * CIN, :]

    # Column-wrap keep masks in padded-slab coordinates.  One left-masked and
    # one right-masked copy of each slab serves all three dy taps, replacing
    # the six per-tap selects of the previous version.
    j = jax.lax.broadcasted_iota(jnp.int32, (CIN_PAD, PAD_LEN), 1)
    keep_l = (j % W) != 0         # dx == 0 taps: x-1 would wrap to previous row
    keep_r = (j % W) != 1         # dx == 2 taps: x+1 would wrap to next row

    slabs = []                    # per batch element: slab copy indexed by dx
    for n in range(N):
        s = slab_ref[n]                                    # (CIN_PAD, PAD_LEN)
        slabs.append((jnp.where(keep_l, s, 0.0), s, jnp.where(keep_r, s, 0.0)))

    # Batch-fused im2col: lane-concatenate the two batch elements per tap, so
    # one (CMID,72)@(72,512) MXU matmul covers the whole batch.  All concats
    # are (8,256)-piece aligned.
    taps = []
    for dy in range(3):
        for dx in range(3):
            off = dy * W + dx     # lane shift of this tap in the padded row
            pieces = [slabs[n][dx][:, off:off + HW] for n in range(N)]
            taps.append(jnp.concatenate(pieces, axis=1))   # (CIN_PAD, N*HW)
    im2col = jnp.concatenate(taps, axis=0)                 # (9*CIN_PAD, N*HW)

    # 3x3 conv (+ folded BN scale) as one MXU matmul; folded BN bias + ReLU.
    acc = jnp.dot(w1, im2col, preferred_element_type=jnp.float32)  # (CMID, N*HW)
    y = jnp.maximum(acc + bn_bias, 0.0)
    # TODO(synk): training-mode Dropout(0.1) (stateful PRNG mask) not
    # implemented; inference dropout is the identity.

    # Re-stack the batch along sublanes (aligned: CMID == 8 rows per piece) and
    # apply the block-diagonal 1x1 conv, producing the output directly in
    # (N*NCLASS, HW) = (8, 256) layout -> two full unmasked (8,128)-tile stores.
    y_stk = jnp.concatenate([y[:, n * HW:(n + 1) * HW] for n in range(N)], axis=0)
    out = jnp.dot(w2, y_stk, preferred_element_type=jnp.float32) + b2
    o_ref[...] = out.astype(o_ref.dtype)


def prepare_params(w1_hwio, gamma, beta, run_mean, run_var, w2_io, b2):
    """One-time parameter preprocessing (hoisted out of the per-call path)."""
    # Fold BatchNorm (inference statistics) into the 3x3 conv weights.
    inv_std = jax.lax.rsqrt(run_var + BN_EPS)
    scale = gamma * inv_std                               # (CMID,)
    bn_bias = beta - run_mean * scale                     # (CMID,)
    w1_folded = w1_hwio * scale                           # (3,3,CIN,CMID)
    w1_p = jnp.pad(w1_folded, ((0, 0), (0, 0), (0, CIN_PAD - CIN), (0, 0)))
    # (3,3,CIN_PAD,CMID) -> (CMID,3,3,CIN_PAD) -> (CMID, 72); column order
    # (dy, dx, c) matches the kernel's im2col row order.
    w1_mat = jnp.transpose(w1_p, (3, 0, 1, 2)).reshape(CMID, 9 * CIN_PAD)

    # Block-diagonal (batch-stacked) 1x1 weights: (N*NCLASS, N*CMID).
    w2_t = jnp.transpose(w2_io, (1, 0))                   # (NCLASS, CMID)
    w2_bd = jnp.kron(jnp.eye(N, dtype=w2_t.dtype), w2_t)  # (N*NCLASS, N*CMID)

    biases = jnp.concatenate([bn_bias, jnp.tile(b2, N)]).reshape(
        CMID + N * NCLASS, 1)
    return w1_mat, w2_bd, biases


@jax.jit
def bisehead_forward(x_nchw, w1_mat, w2_bd, biases):
    """x_nchw: (N, CIN, H, W) float32 -> (N, NCLASS, H, W) float32."""
    # Contiguous reshape only (bitcast, no data movement); all padding is done
    # inside the kernel.
    x2d = x_nchw.reshape(N * CIN, HW)

    out = pl.pallas_call(
        _bisehead_kernel,
        out_shape=jax.ShapeDtypeStruct((N * NCLASS, HW), jnp.float32),
        grid_spec=pltpu.PrefetchScalarGridSpec(
            num_scalar_prefetch=0,
            grid=(1,),  # whole (tiny, latency-bound) problem in one grid step
            in_specs=[
                pl.BlockSpec((N * CIN, HW), lambda i: (0, 0)),
                pl.BlockSpec((CMID, 9 * CIN_PAD), lambda i: (0, 0)),
                pl.BlockSpec((N * NCLASS, N * CMID), lambda i: (0, 0)),
                pl.BlockSpec((CMID + N * NCLASS, 1), lambda i: (0, 0)),
            ],
            out_specs=pl.BlockSpec((N * NCLASS, HW), lambda i: (0, 0)),
            scratch_shapes=[pltpu.VMEM((N, CIN_PAD, PAD_LEN), jnp.float32)],
        ),
        compiler_params=pltpu.CompilerParams(
            dimension_semantics=("arbitrary",)),
    )(x2d, w1_mat, w2_bd, biases)

    # Free reshape (no transpose): rows are already (n, class)-major.
    return out.reshape(N, NCLASS, H, W)


def _reference_forward(x_nchw, w1_hwio, gamma, beta, run_mean, run_var, w2_io, b2):
    """Pure-JAX reference (lax.conv) for correctness checking."""
    x = jnp.transpose(x_nchw, (0, 2, 3, 1))
    y = jax.lax.conv_general_dilated(
        x, w1_hwio, window_strides=(1, 1), padding=((1, 1), (1, 1)),
        dimension_numbers=("NHWC", "HWIO", "NHWC"))
    inv_std = jax.lax.rsqrt(run_var + BN_EPS)
    y = (y - run_mean) * inv_std * gamma + beta
    y = jnp.maximum(y, 0.0)
    out = jnp.einsum("nhwc,cd->nhwd", y, w2_io) + b2
    return jnp.transpose(out, (0, 3, 1, 2))


if __name__ == "__main__":
    key = jax.random.PRNGKey(0)
    kx, kw1, kg, kb, km, kv, kw2, kb2 = jax.random.split(key, 8)

    # Deterministic synthetic parameters (shapes from the module __init__).
    x = jax.random.normal(kx, (N, CIN, H, W), dtype=jnp.float32)
    w1 = jax.random.normal(kw1, (3, 3, CIN, CMID), dtype=jnp.float32) * 0.1  # HWIO
    gamma = jax.random.normal(kg, (CMID,), dtype=jnp.float32) * 0.1 + 1.0
    beta = jax.random.normal(kb, (CMID,), dtype=jnp.float32) * 0.1
    run_mean = jax.random.normal(km, (CMID,), dtype=jnp.float32) * 0.1
    run_var = jax.random.uniform(kv, (CMID,), dtype=jnp.float32, minval=0.5, maxval=1.5)
    w2 = jax.random.normal(kw2, (CMID, NCLASS), dtype=jnp.float32) * 0.1
    b2 = jax.random.normal(kb2, (NCLASS,), dtype=jnp.float32) * 0.1

    # One-time parameter preprocessing (constants at inference).
    w1_mat, w2_bd, biases = prepare_params(w1, gamma, beta, run_mean, run_var, w2, b2)
    w1_mat, w2_bd, biases = jax.block_until_ready((w1_mat, w2_bd, biases))

    out = bisehead_forward(x, w1_mat, w2_bd, biases)
    out = jax.block_until_ready(out)

    ref = _reference_forward(x, w1, gamma, beta, run_mean, run_var, w2, b2)
    assert out.shape == (N, NCLASS, H, W), out.shape
    assert jnp.allclose(out, ref, atol=1e-4, rtol=1e-4), \
        float(jnp.max(jnp.abs(out - ref)))

    print("KERNEL_OK")
</pallas_src>

<mosaic_0001>
module attributes {stable_mosaic.version = 11 : i64} {
  func.func @_bisehead_kernel(%arg0: i32, %arg1: memref<8x256xf32, #tpu.memory_space<vmem>>, %arg2: memref<8x72xf32, #tpu.memory_space<vmem>>, %arg3: memref<8x16xf32, #tpu.memory_space<vmem>>, %arg4: memref<16x1xf32, #tpu.memory_space<vmem>>, %arg5: memref<8x256xf32, #tpu.memory_space<vmem>>, %arg6: memref<2x8x290xf32, #tpu.memory_space<vmem>>) attributes {dimension_semantics = [#tpu.dimension_semantics<arbitrary>], iteration_bounds = array<i64: 1>, scalar_prefetch = 0 : i64, scratch_operands = 1 : i64, tpu.core_type = #tpu.core_type<tc>, window_params = [{pipeline_mode = #tpu.pipeline_mode<synchronous>, transform_indices = @transform_0, window_bounds = array<i64: 8, 256>}, {pipeline_mode = #tpu.pipeline_mode<synchronous>, transform_indices = @transform_1, window_bounds = array<i64: 8, 72>}, {pipeline_mode = #tpu.pipeline_mode<synchronous>, transform_indices = @transform_2, window_bounds = array<i64: 8, 16>}, {pipeline_mode = #tpu.pipeline_mode<synchronous>, transform_indices = @transform_3, window_bounds = array<i64: 16, 1>}, {pipeline_mode = #tpu.pipeline_mode<synchronous>, transform_indices = @transform_4, window_bounds = array<i64: 8, 256>}]} {
    %c0 = arith.constant 0 : index
    %c0_0 = arith.constant 0 : index
    %0 = vector.load %arg2[%c0, %c0_0] : memref<8x72xf32, #tpu.memory_space<vmem>>, vector<8x72xf32>
    %c0_1 = arith.constant 0 : index
    %c0_2 = arith.constant 0 : index
    %1 = vector.load %arg3[%c0_1, %c0_2] : memref<8x16xf32, #tpu.memory_space<vmem>>, vector<8x16xf32>
    %c0_3 = arith.constant 0 : index
    %c0_4 = arith.constant 0 : index
    %2 = vector.load %arg4[%c0_3, %c0_4] : memref<16x1xf32, #tpu.memory_space<vmem>>, vector<8x1xf32>
    %c8 = arith.constant 8 : index
    %c0_5 = arith.constant 0 : index
    %3 = vector.load %arg4[%c8, %c0_5] : memref<16x1xf32, #tpu.memory_space<vmem>>, vector<8x1xf32>
    %cst = arith.constant 0.000000e+00 : f32
    %4 = vector.broadcast %cst : f32 to vector<2x8x290xf32>
    %c0_6 = arith.constant 0 : index
    %c0_7 = arith.constant 0 : index
    %c0_8 = arith.constant 0 : index
    %5 = vector.load %arg6[%c0_6, %c0_7, %c0_8] : memref<2x8x290xf32, #tpu.memory_space<vmem>>, vector<2x8x290xf32>
    tpu.vector_store %arg6[%c0_6, %c0_7, %c0_8], %4 {strides = array<i32>} : memref<2x8x290xf32, #tpu.memory_space<vmem>>, vector<2x8x290xf32>,
    %c0_9 = arith.constant 0 : index
    %c0_10 = arith.constant 0 : index
    %6 = vector.load %arg1[%c0_9, %c0_10] : memref<8x256xf32, #tpu.memory_space<vmem>>, vector<4x256xf32>
    %c0_11 = arith.constant 0 : index
    %c0_12 = arith.constant 0 : index
    %c17 = arith.constant 17 : index
    %7 = vector.load %arg6[%c0_11, %c0_12, %c17] : memref<2x8x290xf32, #tpu.memory_space<vmem>>, vector<1x4x256xf32>
    %8 = vector.shape_cast %7 : vector<1x4x256xf32> to vector<4x256xf32>
    %9 = vector.shape_cast %6 : vector<4x256xf32> to vector<1x4x256xf32>
    tpu.vector_store %arg6[%c0_11, %c0_12, %c17], %9 {strides = array<i32>} : memref<2x8x290xf32, #tpu.memory_space<vmem>>, vector<1x4x256xf32>,
    %c4 = arith.constant 4 : index
    %c0_13 = arith.constant 0 : index
    %10 = vector.load %arg1[%c4, %c0_13] : memref<8x256xf32, #tpu.memory_space<vmem>>, vector<4x256xf32>
    %c1 = arith.constant 1 : index
    %c0_14 = arith.constant 0 : index
    %c17_15 = arith.constant 17 : index
    %11 = vector.load %arg6[%c1, %c0_14, %c17_15] : memref<2x8x290xf32, #tpu.memory_space<vmem>>, vector<1x4x256xf32>
    %12 = vector.shape_cast %11 : vector<1x4x256xf32> to vector<4x256xf32>
    %13 = vector.shape_cast %10 : vector<4x256xf32> to vector<1x4x256xf32>
    tpu.vector_store %arg6[%c1, %c0_14, %c17_15], %13 {strides = array<i32>} : memref<2x8x290xf32, #tpu.memory_space<vmem>>, vector<1x4x256xf32>,
    %14 = tpu.iota {dimensions = array<i32: 1>} : vector<8x290xi32>
    %c16_i32 = arith.constant 16 : i32
    %c0_i32 = arith.constant 0 : i32
    %15 = arith.cmpi eq, %c16_i32, %c0_i32 : i32
    %c1_i32 = arith.constant 1 : i32
    %16 = arith.select %15, %c1_i32, %c16_i32 : i32
    %17 = vector.broadcast %16 : i32 to vector<8x290xi32>
    %18 = arith.remsi %14, %17 : vector<8x290xi32>
    %c0_i32_16 = arith.constant 0 : i32
    %19 = vector.broadcast %c0_i32_16 : i32 to vector<8x290xi32>
    %20 = arith.cmpi ne, %18, %19 : vector<8x290xi32>
    %c0_i32_17 = arith.constant 0 : i32
    %21 = vector.broadcast %c0_i32_17 : i32 to vector<8x290xi32>
    %22 = arith.cmpi slt, %18, %21 : vector<8x290xi32>
    %c0_i32_18 = arith.constant 0 : i32
    %23 = arith.cmpi slt, %16, %c0_i32_18 : i32
    %24 = vector.broadcast %23 : i1 to vector<8x290xi1>
    %25 = vector.broadcast %24 : vector<8x290xi1> to vector<8x290xi1>
    %26 = arith.xori %22, %25 : vector<8x290xi1>
    %27 = arith.andi %26, %20 : vector<8x290xi1>
    %28 = vector.broadcast %16 : i32 to vector<8x290xi32>
    %29 = arith.addi %18, %28 : vector<8x290xi32>
    %30 = arith.select %27, %29, %18 : vector<8x290xi1>, vector<8x290xi32>
    %c0_i32_19 = arith.constant 0 : i32
    %31 = vector.broadcast %c0_i32_19 : i32 to vector<8x290xi32>
    %32 = arith.cmpi ne, %30, %31 : vector<8x290xi32>
    %c16_i32_20 = arith.constant 16 : i32
    %c0_i32_21 = arith.constant 0 : i32
    %33 = arith.cmpi eq, %c16_i32_20, %c0_i32_21 : i32
    %c1_i32_22 = arith.constant 1 : i32
    %34 = arith.select %33, %c1_i32_22, %c16_i32_20 : i32
    %35 = vector.broadcast %34 : i32 to vector<8x290xi32>
    %36 = arith.remsi %14, %35 : vector<8x290xi32>
    %c0_i32_23 = arith.constant 0 : i32
    %37 = vector.broadcast %c0_i32_23 : i32 to vector<8x290xi32>
    %38 = arith.cmpi ne, %36, %37 : vector<8x290xi32>
    %c0_i32_24 = arith.constant 0 : i32
    %39 = vector.broadcast %c0_i32_24 : i32 to vector<8x290xi32>
    %40 = arith.cmpi slt, %36, %39 : vector<8x290xi32>
    %c0_i32_25 = arith.constant 0 : i32
    %41 = arith.cmpi slt, %34, %c0_i32_25 : i32
    %42 = vector.broadcast %41 : i1 to vector<8x290xi1>
    %43 = vector.broadcast %42 : vector<8x290xi1> to vector<8x290xi1>
    %44 = arith.xori %40, %43 : vector<8x290xi1>
    %45 = arith.andi %44, %38 : vector<8x290xi1>
    %46 = vector.broadcast %34 : i32 to vector<8x290xi32>
    %47 = arith.addi %36, %46 : vector<8x290xi32>
    %48 = arith.select %45, %47, %36 : vector<8x290xi1>, vector<8x290xi32>
    %c1_i32_26 = arith.constant 1 : i32
    %49 = vector.broadcast %c1_i32_26 : i32 to vector<8x290xi32>
    %50 = arith.cmpi ne, %48, %49 : vector<8x290xi32>
    %c0_27 = arith.constant 0 : index
    %c0_28 = arith.constant 0 : index
    %c0_29 = arith.constant 0 : index
    %51 = vector.load %arg6[%c0_27, %c0_28, %c0_29] : memref<2x8x290xf32, #tpu.memory_space<vmem>>, vector<1x8x290xf32>
    %52 = vector.shape_cast %51 : vector<1x8x290xf32> to vector<8x290xf32>
    %cst_30 = arith.constant 0.000000e+00 : f32
    %53 = vector.broadcast %cst_30 : f32 to vector<8x290xf32>
    %54 = arith.select %32, %52, %53 : vector<8x290xi1>, vector<8x290xf32>
    %cst_31 = arith.constant 0.000000e+00 : f32
    %55 = vector.broadcast %cst_31 : f32 to vector<8x290xf32>
    %56 = arith.select %50, %52, %55 : vector<8x290xi1>, vector<8x290xf32>
    %c1_32 = arith.constant 1 : index
    %c0_33 = arith.constant 0 : index
    %c0_34 = arith.constant 0 : index
    %57 = vector.load %arg6[%c1_32, %c0_33, %c0_34] : memref<2x8x290xf32, #tpu.memory_space<vmem>>, vector<1x8x290xf32>
    %58 = vector.shape_cast %57 : vector<1x8x290xf32> to vector<8x290xf32>
    %cst_35 = arith.constant 0.000000e+00 : f32
    %59 = vector.broadcast %cst_35 : f32 to vector<8x290xf32>
    %60 = arith.select %32, %58, %59 : vector<8x290xi1>, vector<8x290xf32>
    %cst_36 = arith.constant 0.000000e+00 : f32
    %61 = vector.broadcast %cst_36 : f32 to vector<8x290xf32>
    %62 = arith.select %50, %58, %61 : vector<8x290xi1>, vector<8x290xf32>
    %63 = vector.extract_strided_slice %54 {offsets = [0, 0], sizes = [8, 256], strides = [1, 1]} : vector<8x290xf32> to vector<8x256xf32>
    %64 = vector.extract_strided_slice %60 {offsets = [0, 0], sizes = [8, 256], strides = [1, 1]} : vector<8x290xf32> to vector<8x256xf32>
    %65 = tpu.concatenate %63, %64 in 1 : vector<8x256xf32>, vector<8x256xf32> -> vector<8x512xf32>
    %66 = vector.extract_strided_slice %52 {offsets = [0, 1], sizes = [8, 256], strides = [1, 1]} : vector<8x290xf32> to vector<8x256xf32>
    %67 = vector.extract_strided_slice %58 {offsets = [0, 1], sizes = [8, 256], strides = [1, 1]} : vector<8x290xf32> to vector<8x256xf32>
    %68 = tpu.concatenate %66, %67 in 1 : vector<8x256xf32>, vector<8x256xf32> -> vector<8x512xf32>
    %69 = vector.extract_strided_slice %56 {offsets = [0, 2], sizes = [8, 256], strides = [1, 1]} : vector<8x290xf32> to vector<8x256xf32>
    %70 = vector.extract_strided_slice %62 {offsets = [0, 2], sizes = [8, 256], strides = [1, 1]} : vector<8x290xf32> to vector<8x256xf32>
    %71 = tpu.concatenate %69, %70 in 1 : vector<8x256xf32>, vector<8x256xf32> -> vector<8x512xf32>
    %72 = vector.extract_strided_slice %54 {offsets = [0, 16], sizes = [8, 256], strides = [1, 1]} : vector<8x290xf32> to vector<8x256xf32>
    %73 = vector.extract_strided_slice %60 {offsets = [0, 16], sizes = [8, 256], strides = [1, 1]} : vector<8x290xf32> to vector<8x256xf32>
    %74 = tpu.concatenate %72, %73 in 1 : vector<8x256xf32>, vector<8x256xf32> -> vector<8x512xf32>
    %75 = vector.extract_strided_slice %52 {offsets = [0, 17], sizes = [8, 256], strides = [1, 1]} : vector<8x290xf32> to vector<8x256xf32>
    %76 = vector.extract_strided_slice %58 {offsets = [0, 17], sizes = [8, 256], strides = [1, 1]} : vector<8x290xf32> to vector<8x256xf32>
    %77 = tpu.concatenate %75, %76 in 1 : vector<8x256xf32>, vector<8x256xf32> -> vector<8x512xf32>
    %78 = vector.extract_strided_slice %56 {offsets = [0, 18], sizes = [8, 256], strides = [1, 1]} : vector<8x290xf32> to vector<8x256xf32>
    %79 = vector.extract_strided_slice %62 {offsets = [0, 18], sizes = [8, 256], strides = [1, 1]} : vector<8x290xf32> to vector<8x256xf32>
    %80 = tpu.concatenate %78, %79 in 1 : vector<8x256xf32>, vector<8x256xf32> -> vector<8x512xf32>
    %81 = vector.extract_strided_slice %54 {offsets = [0, 32], sizes = [8, 256], strides = [1, 1]} : vector<8x290xf32> to vector<8x256xf32>
    %82 = vector.extract_strided_slice %60 {offsets = [0, 32], sizes = [8, 256], strides = [1, 1]} : vector<8x290xf32> to vector<8x256xf32>
    %83 = tpu.concatenate %81, %82 in 1 : vector<8x256xf32>, vector<8x256xf32> -> vector<8x512xf32>
    %84 = vector.extract_strided_slice %52 {offsets = [0, 33], sizes = [8, 256], strides = [1, 1]} : vector<8x290xf32> to vector<8x256xf32>
    %85 = vector.extract_strided_slice %58 {offsets = [0, 33], sizes = [8, 256], strides = [1, 1]} : vector<8x290xf32> to vector<8x256xf32>
    %86 = tpu.concatenate %84, %85 in 1 : vector<8x256xf32>, vector<8x256xf32> -> vector<8x512xf32>
    %87 = vector.extract_strided_slice %56 {offsets = [0, 34], sizes = [8, 256], strides = [1, 1]} : vector<8x290xf32> to vector<8x256xf32>
    %88 = vector.extract_strided_slice %62 {offsets = [0, 34], sizes = [8, 256], strides = [1, 1]} : vector<8x290xf32> to vector<8x256xf32>
    %89 = tpu.concatenate %87, %88 in 1 : vector<8x256xf32>, vector<8x256xf32> -> vector<8x512xf32>
    %90 = tpu.concatenate %65, %68, %71, %74, %77, %80, %83, %86, %89 in 0 : vector<8x512xf32>, vector<8x512xf32>, vector<8x512xf32>, vector<8x512xf32>, vector<8x512xf32>, vector<8x512xf32>, vector<8x512xf32>, vector<8x512xf32>, vector<8x512xf32> -> vector<72x512xf32>
    %cst_37 = arith.constant dense<0.000000e+00> : vector<8x512xf32>
    %91 = tpu.matmul %0, %90, %cst_37 {dimension_numbers = #tpu.dot_dimension_numbers<[1], [0], [0], [1], [0, 0, 1, 1], [], []>} : vector<8x72xf32>, vector<72x512xf32>, vector<8x512xf32> -> vector<8x512xf32>
    %92 = vector.broadcast %2 : vector<8x1xf32> to vector<8x512xf32>
    %93 = arith.addf %91, %92 : vector<8x512xf32>
    %cst_38 = arith.constant 0.000000e+00 : f32
    %94 = vector.broadcast %cst_38 : f32 to vector<8x512xf32>
    %95 = arith.maximumf %93, %94 : vector<8x512xf32>
    %96 = vector.extract_strided_slice %95 {offsets = [0, 0], sizes = [8, 256], strides = [1, 1]} : vector<8x512xf32> to vector<8x256xf32>
    %97 = vector.extract_strided_slice %95 {offsets = [0, 256], sizes = [8, 256], strides = [1, 1]} : vector<8x512xf32> to vector<8x256xf32>
    %98 = tpu.concatenate %96, %97 in 0 : vector<8x256xf32>, vector<8x256xf32> -> vector<16x256xf32>
    %cst_39 = arith.constant dense<0.000000e+00> : vector<8x256xf32>
    %99 = tpu.matmul %1, %98, %cst_39 {dimension_numbers = #tpu.dot_dimension_numbers<[1], [0], [0], [1], [0, 0, 1, 1], [], []>} : vector<8x16xf32>, vector<16x256xf32>, vector<8x256xf32> -> vector<8x256xf32>
    %100 = vector.broadcast %3 : vector<8x1xf32> to vector<8x256xf32>
    %101 = arith.addf %99, %100 : vector<8x256xf32>
    %c0_40 = arith.constant 0 : index
    %c0_41 = arith.constant 0 : index
    %102 = vector.load %arg5[%c0_40, %c0_41] : memref<8x256xf32, #tpu.memory_space<vmem>>, vector<8x256xf32>
    tpu.vector_store %arg5[%c0_40, %c0_41], %101 {strides = array<i32>} : memref<8x256xf32, #tpu.memory_space<vmem>>, vector<8x256xf32>,
    return
  }
  func.func @transform_0(%arg0: i32) -> (i32, i32) {
    %c0_i32 = arith.constant 0 : i32
    %c0_i32_0 = arith.constant 0 : i32
    %c0_i32_1 = arith.constant 0 : i32
    return %c0_i32, %c0_i32_0 : i32, i32
  }
  func.func @transform_1(%arg0: i32) -> (i32, i32) {
    %c0_i32 = arith.constant 0 : i32
    %c0_i32_0 = arith.constant 0 : i32
    %c0_i32_1 = arith.constant 0 : i32
    return %c0_i32, %c0_i32_0 : i32, i32
  }
  func.func @transform_2(%arg0: i32) -> (i32, i32) {
    %c0_i32 = arith.constant 0 : i32
    %c0_i32_0 = arith.constant 0 : i32
    %c0_i32_1 = arith.constant 0 : i32
    return %c0_i32, %c0_i32_0 : i32, i32
  }
  func.func @transform_3(%arg0: i32) -> (i32, i32) {
    %c0_i32 = arith.constant 0 : i32
    %c0_i32_0 = arith.constant 0 : i32
    %c0_i32_1 = arith.constant 0 : i32
    return %c0_i32, %c0_i32_0 : i32, i32
  }
  func.func @transform_4(%arg0: i32) -> (i32, i32) {
    %c0_i32 = arith.constant 0 : i32
    %c0_i32_0 = arith.constant 0 : i32
    %c0_i32_1 = arith.constant 0 : i32
    return %c0_i32, %c0_i32_0 : i32, i32
  }
}

</mosaic_0001>

<llo_original>
// kernel: bisehead_forward.1
$region0: #{bisehead_forward.1}
  #allocation0 [shape = 'u32[]', space=smem, size = 0x4, offset = 0x4, fixed_abs, tag = 'smem constant byte address 0x4 - core index']
  #allocation1 [shape = 'u32[72,128]{1,0:T(1,128)}', space=vmem, size = 0x9000, scoped, tag = 'internal scratch']
  #allocation2 [shape = 'f32[2,8,290]{2,1,0:T(8,128)}', space=vmem, size = 0x6000, scoped, tag = 'scratch operand']
  %s0 = inlined_call_operand.vmem [shape: f32[8,256], index: 0, kind: input, shape index: {}]
  %s1 = inlined_call_operand.vmem [shape: f32[8,72], index: 1, kind: input, shape index: {}]
  %s2 = inlined_call_operand.vmem [shape: f32[8,16], index: 2, kind: input, shape index: {}]
  %s3 = inlined_call_operand.vmem [shape: f32[16,1], index: 3, kind: input, shape index: {}]
  %s4 = inlined_call_operand.vmem [shape: f32[8,256], index: 4, kind: output, shape index: {}]
  %s5 = sld [smem:[#allocation0]]
  $region26: #{bisehead_forward.1} parent=0
    _
  %s7 = ssub.s32 1, %s5
  %s8 = scalar_select 0, %s7, %s5
  // Predicated region
  $region2: #{bisehead_forward.1} parent=0 // pred_check
    _
  $region3: #{bisehead_forward.1} parent=0 // pred_check_branch
    %10 = sbr.rel (0) target = $region5
  $region4: #{bisehead_forward.1} parent=0 // pred_region
    _
  $region5: #{bisehead_forward.1} parent=0 // pred_fallthru
    _
  // Predicated region
  $region6: #{bisehead_forward.1} parent=0 // pred_check
    _
  $region7: #{bisehead_forward.1} parent=0 // pred_check_branch
    %12 = sbr.rel (0) target = $region9
  $region8: #{bisehead_forward.1} parent=0 // pred_region
    _
  $region9: #{bisehead_forward.1} parent=0 // pred_fallthru
    _
  // Predicated region
  $region10: #{bisehead_forward.1} parent=0 // pred_check
    _
  $region11: #{bisehead_forward.1} parent=0 // pred_check_branch
    %14 = sbr.rel (0) target = $region13
  $region12: #{bisehead_forward.1} parent=0 // pred_region
    _
  $region13: #{bisehead_forward.1} parent=0 // pred_fallthru
    _
  // Predicated region
  $region14: #{bisehead_forward.1} parent=0 // pred_check
    _
  $region15: #{bisehead_forward.1} parent=0 // pred_check_branch
    %16 = sbr.rel (0) target = $region17
  $region16: #{bisehead_forward.1} parent=0 // pred_region
    _
  $region17: #{bisehead_forward.1} parent=0 // pred_fallthru
    _
  %v17 = vld [vmem:[%s1] sm:$0xff]
  %v18 = vld [vmem:[%s2] sm:$0xff]
  %v19 = vld [vmem:[%s3] sm:$0xff]
  %v20 = vld [vmem:[%s3 + $0x8] sm:$0xff]
  %21 = vst [vmem:[#allocation2] sm:$0xff] 0.0
  %22 = vst [vmem:[#allocation2 + $0x8] sm:$0xff] 0.0
  %vm23 = vcmask 277504
  %24 = vst.msk [vmem:[#allocation2 + $0x10] sm:$0xff] %vm23, 0.0
  %25 = vst [vmem:[#allocation2 + $0x18] sm:$0xff] 0.0
  %26 = vst [vmem:[#allocation2 + $0x20] sm:$0xff] 0.0
  %27 = vst.msk [vmem:[#allocation2 + $0x28] sm:$0xff] %vm23, 0.0
  %v28 = vld [vmem:[%s0] sm:$0xf]
  %v29 = vld [vmem:[%s0 + $0x8] sm:$0xf]
  %32 = vrot.lane.b32.xlu0 %v28, 17
  %v33 = vpop.permute.xlu0 %32
  %34 = vrot.lane.b32.xlu0 %v29, 17
  %v35 = vpop.permute.xlu0 %34
  %vm36 = vcmask 138240
  %v37 = vsel %vm36, %v33, %v35
  %vm41 = vcmask 1043592
  %42 = vst.msk [vmem:[#allocation2] sm:$0xf] %vm41, %v33
  %43 = vst [vmem:[#allocation2 + $0x8] sm:$0xf] %v37
  %vm44 = vcmask 134144
  %45 = vst.msk [vmem:[#allocation2 + $0x10] sm:$0xf] %vm44, %v35
  %v46 = vld [vmem:[%s0] sm:$0xf0]
  %v47 = vld [vmem:[%s0 + $0x8] sm:$0xf0]
  %v50 = vrot.slane %v46, 4
  %v51 = vrot.slane %v47, 4
  %52 = vrot.lane.b32.xlu0 %v50, 17
  %v53 = vpop.permute.xlu0 %52
  %54 = vrot.lane.b32.xlu0 %v51, 17
  %v55 = vpop.permute.xlu0 %54
  %v56 = vsel %vm36, %v53, %v55
  %s60 = scalar_lea.vmem [#allocation2], 24
  %61 = vst.msk [vmem:[%s60] sm:$0xf] %vm41, %v53
  %62 = vst [vmem:[%s60 + $0x8] sm:$0xf] %v56
  %63 = vst.msk [vmem:[%s60 + $0x10] sm:$0xf] %vm44, %v55
  %v64 = vlaneseq
  %v65 = vand.u32 %v64, 127
  %v66 = vadd.s32 %v65, 128
  %v67 = vadd.s32 %v65, 256
  %vm68 = vcmp.lt.s32.totalorder %v65, 0
  %v69 = vsub.s32 0, %v65
  %v70 = vsel %vm68, %v69, %v65
  %v71 = vshrl.u32 %v70, 4
  %v72 = vand.u32 %v70, 15
  %v73 = vsub.s32 0, %v72
  %v74 = vsel %vm68, %v73, %v72
  %vm75 = vcmp.lt.s32.totalorder %v66, 0
  %v76 = vsub.s32 0, %v66
  %v77 = vsel %vm75, %v76, %v66
  %v78 = vshrl.u32 %v77, 4
  %v79 = vand.u32 %v77, 15
  %v80 = vsub.s32 0, %v79
  %v81 = vsel %vm75, %v80, %v79
  %vm82 = vcmp.lt.s32.totalorder %v67, 0
  %v83 = vsub.s32 0, %v67
  %v84 = vsel %vm82, %v83, %v67
  %v85 = vshrl.u32 %v84, 4
  %v86 = vand.u32 %v84, 15
  %v87 = vsub.s32 0, %v86
  %v88 = vsel %vm82, %v87, %v86
  %vm89 = vcmp.ne.s32.totalorder %v74, 0
  %vm90 = vcmp.ne.s32.totalorder %v81, 0
  %vm91 = vcmp.ne.s32.totalorder %v88, 0
  %vm92 = vcmp.lt.s32.totalorder %v74, 0
  %vm93 = vcmp.lt.s32.totalorder %v81, 0
  %vm94 = vcmp.lt.s32.totalorder %v88, 0
  %vm95 = vmand %vm92, %vm89
  %vm96 = vmand %vm93, %vm90
  %vm97 = vmand %vm94, %vm91
  %v98 = vadd.s32 %v74, 16
  %v99 = vadd.s32 %v81, 16
  %v100 = vadd.s32 %v88, 16
  %v101 = vsel %vm95, %v98, %v74
  %v102 = vsel %vm96, %v99, %v81
  %v103 = vsel %vm97, %v100, %v88
  %vm104 = vcmp.ne.s32.totalorder %v101, 0
  %vm105 = vcmp.ne.s32.totalorder %v102, 0
  %vm106 = vcmp.ne.s32.totalorder %v103, 0
  %vm107 = vcmp.ne.s32.totalorder %v101, 1
  %vm108 = vcmp.ne.s32.totalorder %v102, 1
  %vm109 = vcmp.ne.s32.totalorder %v103, 1
  %v110 = vld [vmem:[#allocation2] sm:$0xff]
  %v111 = vld [vmem:[#allocation2 + $0x8] sm:$0xff]
  %v112 = vld [vmem:[#allocation2 + $0x10] sm:$0xff]
  %v113 = vsel %vm104, %v110, 0.0
  %v114 = vsel %vm105, %v111, 0.0
  %v115 = vsel %vm106, %v112, 0.0
  %v116 = vsel %vm107, %v110, 0.0
  %v117 = vsel %vm108, %v111, 0.0
  %v118 = vsel %vm109, %v112, 0.0
  %v119 = vld [vmem:[%s60] sm:$0xff]
  %v120 = vld [vmem:[%s60 + $0x8] sm:$0xff]
  %v121 = vld [vmem:[%s60 + $0x10] sm:$0xff]
  %v122 = vsel %vm104, %v119, 0.0
  %v123 = vsel %vm105, %v120, 0.0
  %v124 = vsel %vm106, %v121, 0.0
  %v125 = vsel %vm107, %v119, 0.0
  %v126 = vsel %vm108, %v120, 0.0
  %v127 = vsel %vm109, %v121, 0.0
  %131 = vrot.lane.b32.xlu0 %v110, 127
  %v132 = vpop.permute.xlu0 %131
  %133 = vrot.lane.b32.xlu0 %v111, 127
  %v134 = vpop.permute.xlu0 %133
  %135 = vrot.lane.b32.xlu0 %v112, 127
  %v136 = vpop.permute.xlu0 %135
  %vm137 = vcmask 1039360
  %v138 = vsel %vm137, %v132, %v134
  %v139 = vsel %vm137, %v134, %v136
  %145 = vrot.lane.b32.xlu0 %v119, 127
  %v146 = vpop.permute.xlu0 %145
  %147 = vrot.lane.b32.xlu0 %v120, 127
  %v148 = vpop.permute.xlu0 %147
  %149 = vrot.lane.b32.xlu0 %v121, 127
  %v150 = vpop.permute.xlu0 %149
  %v151 = vsel %vm137, %v146, %v148
  %v152 = vsel %vm137, %v148, %v150
  %158 = vrot.lane.b32.xlu0 %v116, 126
  %v159 = vpop.permute.xlu0 %158
  %160 = vrot.lane.b32.xlu0 %v117, 126
  %v161 = vpop.permute.xlu0 %160
  %162 = vrot.lane.b32.xlu0 %v118, 126
  %v163 = vpop.permute.xlu0 %162
  %vm164 = vcmask 1031168
  %v165 = vsel %vm164, %v159, %v161
  %v166 = vsel %vm164, %v161, %v163
  %172 = vrot.lane.b32.xlu0 %v125, 126
  %v173 = vpop.permute.xlu0 %172
  %174 = vrot.lane.b32.xlu0 %v126, 126
  %v175 = vpop.permute.xlu0 %174
  %176 = vrot.lane.b32.xlu0 %v127, 126
  %v177 = vpop.permute.xlu0 %176
  %v178 = vsel %vm164, %v173, %v175
  %v179 = vsel %vm164, %v175, %v177
  %185 = vrot.lane.b32.xlu0 %v113, 112
  %v186 = vpop.permute.xlu0 %185
  %187 = vrot.lane.b32.xlu0 %v114, 112
  %v188 = vpop.permute.xlu0 %187
  %189 = vrot.lane.b32.xlu0 %v115, 112
  %v190 = vpop.permute.xlu0 %189
  %vm191 = vcmask 916480
  %v192 = vsel %vm191, %v186, %v188
  %v193 = vsel %vm191, %v188, %v190
  %199 = vrot.lane.b32.xlu0 %v122, 112
  %v200 = vpop.permute.xlu0 %199
  %201 = vrot.lane.b32.xlu0 %v123, 112
  %v202 = vpop.permute.xlu0 %201
  %203 = vrot.lane.b32.xlu0 %v124, 112
  %v204 = vpop.permute.xlu0 %203
  %v205 = vsel %vm191, %v200, %v202
  %v206 = vsel %vm191, %v202, %v204
  %209 = vrot.lane.b32.xlu0 %v110, 111
  %v210 = vpop.permute.xlu0 %209
  %211 = vrot.lane.b32.xlu0 %v111, 111
  %v212 = vpop.permute.xlu0 %211
  %213 = vrot.lane.b32.xlu0 %v112, 111
  %v214 = vpop.permute.xlu0 %213
  %vm215 = vcmask 908288
  %v216 = vsel %vm215, %v210, %v212
  %v217 = vsel %vm215, %v212, %v214
  %220 = vrot.lane.b32.xlu0 %v119, 111
  %v221 = vpop.permute.xlu0 %220
  %222 = vrot.lane.b32.xlu0 %v120, 111
  %v223 = vpop.permute.xlu0 %222
  %224 = vrot.lane.b32.xlu0 %v121, 111
  %v225 = vpop.permute.xlu0 %224
  %v226 = vsel %vm215, %v221, %v223
  %v227 = vsel %vm215, %v223, %v225
  %230 = vrot.lane.b32.xlu0 %v116, 110
  %v231 = vpop.permute.xlu0 %230
  %232 = vrot.lane.b32.xlu0 %v117, 110
  %v233 = vpop.permute.xlu0 %232
  %234 = vrot.lane.b32.xlu0 %v118, 110
  %v235 = vpop.permute.xlu0 %234
  %vm236 = vcmask 900096
  %v237 = vsel %vm236, %v231, %v233
  %v238 = vsel %vm236, %v233, %v235
  %241 = vrot.lane.b32.xlu0 %v125, 110
  %v242 = vpop.permute.xlu0 %241
  %243 = vrot.lane.b32.xlu0 %v126, 110
  %v244 = vpop.permute.xlu0 %243
  %245 = vrot.lane.b32.xlu0 %v127, 110
  %v246 = vpop.permute.xlu0 %245
  %v247 = vsel %vm236, %v242, %v244
  %v248 = vsel %vm236, %v244, %v246
  %251 = vrot.lane.b32.xlu0 %v113, 96
  %v252 = vpop.permute.xlu0 %251
  %253 = vrot.lane.b32.xlu0 %v114, 96
  %v254 = vpop.permute.xlu0 %253
  %255 = vrot.lane.b32.xlu0 %v115, 96
  %v256 = vpop.permute.xlu0 %255
  %vm257 = vcmask 785408
  %v258 = vsel %vm257, %v252, %v254
  %v259 = vsel %vm257, %v254, %v256
  %262 = vrot.lane.b32.xlu0 %v122, 96
  %v263 = vpop.permute.xlu0 %262
  %264 = vrot.lane.b32.xlu0 %v123, 96
  %v265 = vpop.permute.xlu0 %264
  %266 = vrot.lane.b32.xlu0 %v124, 96
  %v267 = vpop.permute.xlu0 %266
  %v268 = vsel %vm257, %v263, %v265
  %v269 = vsel %vm257, %v265, %v267
  %272 = vrot.lane.b32.xlu0 %v110, 95
  %v273 = vpop.permute.xlu0 %272
  %274 = vrot.lane.b32.xlu0 %v111, 95
  %v275 = vpop.permute.xlu0 %274
  %276 = vrot.lane.b32.xlu0 %v112, 95
  %v277 = vpop.permute.xlu0 %276
  %vm278 = vcmask 777216
  %v279 = vsel %vm278, %v273, %v275
  %v280 = vsel %vm278, %v275, %v277
  %283 = vrot.lane.b32.xlu0 %v119, 95
  %v284 = vpop.permute.xlu0 %283
  %285 = vrot.lane.b32.xlu0 %v120, 95
  %v286 = vpop.permute.xlu0 %285
  %287 = vrot.lane.b32.xlu0 %v121, 95
  %v288 = vpop.permute.xlu0 %287
  %v289 = vsel %vm278, %v284, %v286
  %v290 = vsel %vm278, %v286, %v288
  %293 = vrot.lane.b32.xlu0 %v116, 94
  %v294 = vpop.permute.xlu0 %293
  %295 = vrot.lane.b32.xlu0 %v117, 94
  %v296 = vpop.permute.xlu0 %295
  %297 = vrot.lane.b32.xlu0 %v118, 94
  %v298 = vpop.permute.xlu0 %297
  %vm299 = vcmask 769024
  %v300 = vsel %vm299, %v294, %v296
  %v301 = vsel %vm299, %v296, %v298
  %304 = vrot.lane.b32.xlu0 %v125, 94
  %v305 = vpop.permute.xlu0 %304
  %306 = vrot.lane.b32.xlu0 %v126, 94
  %v307 = vpop.permute.xlu0 %306
  %308 = vrot.lane.b32.xlu0 %v127, 94
  %v309 = vpop.permute.xlu0 %308
  %v310 = vsel %vm299, %v305, %v307
  %v311 = vsel %vm299, %v307, %v309
  %315 = vset.pattern.permute.xlu0 0
  %316 = vperm.xlu0 %315, %v19
  %v317 = vpop.permute.xlu0 %316
  %vm319 = vcmask 588800
  %v321 = vsel %vm319, %v17, 0
  %323 = vmatpush.msra.mxu0 0.0
  %324 = vmatpush.msra.mxu0 0.0
  %325 = vmatpush.msra.mxu0 0.0
  %326 = vmatpush.msra.mxu0 0.0
  %327 = vmatpush.msra.mxu0 0.0
  %328 = vmatpush.msra.mxu0 0.0
  %329 = vmatpush.msra.mxu0 0.0
  %330 = vmatpush.msra.mxu0 %v300
  %331 = vmatpush.msra.mxu0 %v279
  %332 = vmatpush.msra.mxu0 %v258
  %333 = vmatpush.msra.mxu0 %v237
  %334 = vmatpush.msra.mxu0 %v216
  %335 = vmatpush.msra.mxu0 %v192
  %336 = vmatpush.msra.mxu0 %v165
  %337 = vmatpush.msra.mxu0 %v138
  %338 = vmatpush.msra.mxu0 %v113
  %339 = vmatmul.f32.gmra.mxu0 %v321
  %v340 = vpop.f32.mrf.mxu0
  %v341 = vadd.f32 %v317, %v340
  %342 = vdwg.mxu0
  %343 = vmatpush.msra.mxu0 0.0
  %344 = vmatpush.msra.mxu0 0.0
  %345 = vmatpush.msra.mxu0 0.0
  %346 = vmatpush.msra.mxu0 0.0
  %347 = vmatpush.msra.mxu0 0.0
  %348 = vmatpush.msra.mxu0 0.0
  %349 = vmatpush.msra.mxu0 0.0
  %350 = vmatpush.msra.mxu0 %v301
  %351 = vmatpush.msra.mxu0 %v280
  %352 = vmatpush.msra.mxu0 %v259
  %353 = vmatpush.msra.mxu0 %v238
  %354 = vmatpush.msra.mxu0 %v217
  %355 = vmatpush.msra.mxu0 %v193
  %356 = vmatpush.msra.mxu0 %v166
  %357 = vmatpush.msra.mxu0 %v139
  %358 = vmatpush.msra.mxu0 %v114
  %359 = vmatmul.f32.gmra.mxu0 %v321
  %v360 = vpop.f32.mrf.mxu0
  %v361 = vadd.f32 %v317, %v360
  %362 = vdwg.mxu0
  %363 = vmatpush.msra.mxu0 0.0
  %364 = vmatpush.msra.mxu0 0.0
  %365 = vmatpush.msra.mxu0 0.0
  %366 = vmatpush.msra.mxu0 0.0
  %367 = vmatpush.msra.mxu0 0.0
  %368 = vmatpush.msra.mxu0 0.0
  %369 = vmatpush.msra.mxu0 0.0
  %370 = vmatpush.msra.mxu0 %v310
  %371 = vmatpush.msra.mxu0 %v289
  %372 = vmatpush.msra.mxu0 %v268
  %373 = vmatpush.msra.mxu0 %v247
  %374 = vmatpush.msra.mxu0 %v226
  %375 = vmatpush.msra.mxu0 %v205
  %376 = vmatpush.msra.mxu0 %v178
  %377 = vmatpush.msra.mxu0 %v151
  %378 = vmatpush.msra.mxu0 %v122
  %379 = vmatmul.f32.gmra.mxu0 %v321
  %v380 = vpop.f32.mrf.mxu0
  %v381 = vadd.f32 %v317, %v380
  %382 = vdwg.mxu0
  %383 = vmatpush.msra.mxu0 0.0
  %384 = vmatpush.msra.mxu0 0.0
  %385 = vmatpush.msra.mxu0 0.0
  %386 = vmatpush.msra.mxu0 0.0
  %387 = vmatpush.msra.mxu0 0.0
  %388 = vmatpush.msra.mxu0 0.0
  %389 = vmatpush.msra.mxu0 0.0
  %390 = vmatpush.msra.mxu0 %v311
  %391 = vmatpush.msra.mxu0 %v290
  %392 = vmatpush.msra.mxu0 %v269
  %393 = vmatpush.msra.mxu0 %v248
  %394 = vmatpush.msra.mxu0 %v227
  %395 = vmatpush.msra.mxu0 %v206
  %396 = vmatpush.msra.mxu0 %v179
  %397 = vmatpush.msra.mxu0 %v152
  %398 = vmatpush.msra.mxu0 %v123
  %399 = vmatmul.f32.gmra.mxu0 %v321
  %v400 = vpop.f32.mrf.mxu0
  %v401 = vadd.f32 %v317, %v400
  %402 = vdwg.mxu0
  %v403 = vmax.f32 %v341, 0.0
  %v404 = vmax.f32 %v361, 0.0
  %v405 = vmax.f32 %v381, 0.0
  %v406 = vmax.f32 %v401, 0.0
  %408 = vset.pattern.permute.xlu0 0
  %409 = vperm.xlu0 %408, %v20
  %v410 = vpop.permute.xlu0 %409
  %vm412 = vcmask 130048
  %v414 = vsel %vm412, %v18, 0
  %416 = vmatpush.msra.mxu0 0.0
  %417 = vmatpush.msra.mxu0 0.0
  %418 = vmatpush.msra.mxu0 0.0
  %419 = vmatpush.msra.mxu0 0.0
  %420 = vmatpush.msra.mxu0 0.0
  %421 = vmatpush.msra.mxu0 0.0
  %422 = vmatpush.msra.mxu0 0.0
  %423 = vmatpush.msra.mxu0 0.0
  %424 = vmatpush.msra.mxu0 0.0
  %425 = vmatpush.msra.mxu0 0.0
  %426 = vmatpush.msra.mxu0 0.0
  %427 = vmatpush.msra.mxu0 0.0
  %428 = vmatpush.msra.mxu0 0.0
  %429 = vmatpush.msra.mxu0 0.0
  %430 = vmatpush.msra.mxu0 %v405
  %431 = vmatpush.msra.mxu0 %v403
  %432 = vmatmul.f32.gmra.mxu0 %v414
  %v433 = vpop.f32.mrf.mxu0
  %v434 = vadd.f32 %v410, %v433
  %435 = vdwg.mxu0
  %436 = vmatpush.msra.mxu0 0.0
  %437 = vmatpush.msra.mxu0 0.0
  %438 = vmatpush.msra.mxu0 0.0
  %439 = vmatpush.msra.mxu0 0.0
  %440 = vmatpush.msra.mxu0 0.0
  %441 = vmatpush.msra.mxu0 0.0
  %442 = vmatpush.msra.mxu0 0.0
  %443 = vmatpush.msra.mxu0 0.0
  %444 = vmatpush.msra.mxu0 0.0
  %445 = vmatpush.msra.mxu0 0.0
  %446 = vmatpush.msra.mxu0 0.0
  %447 = vmatpush.msra.mxu0 0.0
  %448 = vmatpush.msra.mxu0 0.0
  %449 = vmatpush.msra.mxu0 0.0
  %450 = vmatpush.msra.mxu0 %v406
  %451 = vmatpush.msra.mxu0 %v404
  %452 = vmatmul.f32.gmra.mxu0 %v414
  %v453 = vpop.f32.mrf.mxu0
  %v454 = vadd.f32 %v410, %v453
  %455 = vdwg.mxu0
  %456 = vst [vmem:[%s4] sm:$0xff] %v434
  %457 = vst [vmem:[%s4 + $0x8] sm:$0xff] %v454
  // Predicated region
  $region18: #{bisehead_forward.1} parent=0 // pred_check
    _
  $region19: #{bisehead_forward.1} parent=0 // pred_check_branch
    %459 = sbr.rel (0) target = $region21
  $region20: #{bisehead_forward.1} parent=0 // pred_region
    _
  $region21: #{bisehead_forward.1} parent=0 // pred_fallthru
    _
  // Predicated region
  $region22: #{bisehead_forward.1} parent=0 // pred_check
    _
  $region23: #{bisehead_forward.1} parent=0 // pred_check_branch
    %461 = sbr.rel (0) target = $region25
  $region24: #{bisehead_forward.1} parent=0 // pred_region
    _
  $region25: #{bisehead_forward.1} parent=0 // pred_fallthru
    _

</llo_original>
